<compile_context>
chip_gen: v5e
topology: v5e:2x2
jax: 0.10.0
libtpu: 0.0.40
codegen_flags: <defaults>
</compile_context>

<pallas_src>
import math

import jax
import jax.numpy as jnp
from jax.experimental import pallas as pl
from jax.experimental.pallas import tpu as pltpu


def _make_position_encoding(d_model: int, max_len: int) -> jnp.ndarray:
    """Sinusoidal positional encoding, identical math to the PyTorch module."""
    pe = jnp.zeros((max_len, d_model), dtype=jnp.float32)
    positions = jnp.arange(0, max_len, dtype=jnp.float32)[:, None]          # (L, 1)
    div_term = jnp.exp(
        jnp.arange(0, d_model, 2, dtype=jnp.float32) * (-math.log(10000.0) / d_model)
    )                                                                        # (D/2,)
    pe = pe.at[:, 0::2].set(jnp.sin(positions * div_term))
    pe = pe.at[:, 1::2].set(jnp.cos(positions * div_term))
    return pe                                                                # (L, D)


def _make_token_embeddings(key, vocab_size: int, d_model: int) -> jnp.ndarray:
    """nn.Embedding(vocab_size, d_model, padding_idx=0): N(0,1) init, row 0 zeroed."""
    w = jax.random.normal(key, (vocab_size, d_model), dtype=jnp.float32)
    w = w.at[0].set(0.0)  # padding_idx=0 -> zero embedding row
    return w


def _pick_seq_tile(seq_len: int, max_tile: int = 512) -> int:
    """Largest seq tile <= max_tile that divides seq_len (multiple of 8 if < seq_len)."""
    if seq_len <= max_tile:
        return seq_len
    for t in range(max_tile, 7, -1):
        if seq_len % t == 0 and t % 8 == 0:
            return t
    return seq_len


def _embed_kernel(ids_ref, tok_ref, pos_ref, out_ref):
    # ids_ref: (1, ts, 1) int32   — token ids for this (batch, seq-tile) block
    # tok_ref: (V, D)  float32    — full token table, VMEM-resident across the grid
    # pos_ref: (ts, D) float32    — positional rows for this seq tile
    # out_ref: (1, ts, D) float32
    ts = ids_ref.shape[1]
    V = tok_ref.shape[0]

    ids = ids_ref[0]                                               # (ts, 1) int32
    vocab_iota = jax.lax.broadcasted_iota(jnp.int32, (ts, V), 1)   # (ts, V)
    one_hot = (ids == vocab_iota).astype(jnp.float32)              # exact 0/1 rows

    # One-hot gather on the MXU: selects exactly one table row per token.
    tok = jnp.dot(
        one_hot,
        tok_ref[...],
        preferred_element_type=jnp.float32,
        precision=jax.lax.Precision.HIGHEST,
    )                                                              # (ts, D)

    out_ref[0] = tok + pos_ref[...]


def input_embeddings_forward(x_ids: jnp.ndarray,
                             token_table: jnp.ndarray,
                             pos_table: jnp.ndarray,
                             *,
                             seq_tile: int | None = None) -> jnp.ndarray:
    """
    x_ids:       (B, S) integer token indices
    token_table: (V, D) float32
    pos_table:   (max_len, D) float32
    returns:     (B, S, D) float32 = token_table[x_ids] + pos_table[:S]
    """
    B, S = x_ids.shape
    V, D = token_table.shape
    L = pos_table.shape[0]
    if S > L:
        raise ValueError(f"sequence length {S} exceeds max_len {L}")

    ts = seq_tile if seq_tile is not None else _pick_seq_tile(S)
    if S % ts != 0:
        raise ValueError(f"seq_tile {ts} must divide sequence length {S}")
    n_seq_tiles = S // ts

    ids3 = x_ids.astype(jnp.int32).reshape(B, S, 1)            # (B, S, 1)
    tok_f32 = token_table.astype(jnp.float32)                  # (V, D)
    pos_slab = pos_table[:S].astype(jnp.float32)               # (S, D) — sliced once

    grid = (B, n_seq_tiles)

    out = pl.pallas_call(
        _embed_kernel,
        out_shape=jax.ShapeDtypeStruct((B, S, D), jnp.float32),
        grid_spec=pltpu.PrefetchScalarGridSpec(
            num_scalar_prefetch=0,
            grid=grid,
            in_specs=[
                # token ids for this (batch, seq-tile) block
                pl.BlockSpec((1, ts, 1), lambda b, s: (b, s, 0)),
                # full token table, same block every step -> stays resident in VMEM
                pl.BlockSpec((V, D), lambda b, s: (0, 0)),
                # positional rows for this seq tile (shared across batch)
                pl.BlockSpec((ts, D), lambda b, s: (s, 0)),
            ],
            out_specs=pl.BlockSpec((1, ts, D), lambda b, s: (b, s, 0)),
        ),
        compiler_params=pltpu.CompilerParams(
            dimension_semantics=("parallel", "parallel"),
        ),
    )(ids3, tok_f32, pos_slab)

    return out


if __name__ == "__main__":
    # Small, module-consistent shapes.
    vocab_size = 32
    d_model = 32
    max_len = 64
    batch = 2
    seq = 8

    key = jax.random.PRNGKey(0)
    k_emb, k_ids = jax.random.split(key)

    token_table = _make_token_embeddings(k_emb, vocab_size, d_model)
    pos_table = _make_position_encoding(d_model, max_len)

    x_ids = jax.random.randint(k_ids, (batch, seq), minval=0, maxval=vocab_size,
                               dtype=jnp.int32)

    out = input_embeddings_forward(x_ids, token_table, pos_table)
    out = jax.block_until_ready(out)

    # Pure-JAX reference check.
    ref = token_table[x_ids] + pos_table[None, :seq, :]
    assert out.shape == (batch, seq, d_model)
    assert jnp.allclose(out, ref, atol=1e-4, rtol=1e-4), "mismatch vs reference"

    print("KERNEL_OK")
</pallas_src>

<mosaic_0001>
module attributes {stable_mosaic.version = 11 : i64} {
  func.func @_embed_kernel(%arg0: i32, %arg1: i32, %arg2: memref<1x8x1xi32, #tpu.memory_space<vmem>>, %arg3: memref<32x32xf32, #tpu.memory_space<vmem>>, %arg4: memref<8x32xf32, #tpu.memory_space<vmem>>, %arg5: memref<1x8x32xf32, #tpu.memory_space<vmem>>) attributes {dimension_semantics = [#tpu.dimension_semantics<parallel>, #tpu.dimension_semantics<parallel>], iteration_bounds = array<i64: 2, 1>, scalar_prefetch = 0 : i64, scratch_operands = 0 : i64, tpu.core_type = #tpu.core_type<tc>, window_params = [{transform_indices = @transform_0, window_bounds = array<i64: 1, 8, 1>}, {pipeline_mode = #tpu.pipeline_mode<synchronous>, transform_indices = @transform_1, window_bounds = array<i64: 32, 32>}, {transform_indices = @transform_2, window_bounds = array<i64: 8, 32>}, {transform_indices = @transform_3, window_bounds = array<i64: 1, 8, 32>}]} {
    %c0 = arith.constant 0 : index
    %c0_0 = arith.constant 0 : index
    %c0_1 = arith.constant 0 : index
    %0 = vector.load %arg2[%c0, %c0_0, %c0_1] : memref<1x8x1xi32, #tpu.memory_space<vmem>>, vector<1x8x1xi32>
    %1 = vector.shape_cast %0 : vector<1x8x1xi32> to vector<8x1xi32>
    %2 = tpu.iota {dimensions = array<i32: 1>} : vector<8x32xi32>
    %3 = vector.broadcast %1 : vector<8x1xi32> to vector<8x32xi32>
    %4 = arith.cmpi eq, %3, %2 : vector<8x32xi32>
    %5 = arith.extui %4 : vector<8x32xi1> to vector<8x32xi32>
    %6 = arith.sitofp %5 : vector<8x32xi32> to vector<8x32xf32>
    %c0_2 = arith.constant 0 : index
    %c0_3 = arith.constant 0 : index
    %7 = vector.load %arg3[%c0_2, %c0_3] : memref<32x32xf32, #tpu.memory_space<vmem>>, vector<32x32xf32>
    %cst = arith.constant dense<0.000000e+00> : vector<8x32xf32>
    %8 = tpu.matmul %6, %7, %cst {dimension_numbers = #tpu.dot_dimension_numbers<[1], [0], [0], [1], [0, 0, 1, 1], [], []>, precision = #tpu.contract_precision<fp32>} : vector<8x32xf32>, vector<32x32xf32>, vector<8x32xf32> -> vector<8x32xf32>
    %c0_4 = arith.constant 0 : index
    %c0_5 = arith.constant 0 : index
    %9 = vector.load %arg4[%c0_4, %c0_5] : memref<8x32xf32, #tpu.memory_space<vmem>>, vector<8x32xf32>
    %10 = arith.addf %8, %9 : vector<8x32xf32>
    %c0_6 = arith.constant 0 : index
    %c0_7 = arith.constant 0 : index
    %c0_8 = arith.constant 0 : index
    %11 = vector.load %arg5[%c0_6, %c0_7, %c0_8] : memref<1x8x32xf32, #tpu.memory_space<vmem>>, vector<1x8x32xf32>
    %12 = vector.shape_cast %11 : vector<1x8x32xf32> to vector<8x32xf32>
    %13 = vector.shape_cast %10 : vector<8x32xf32> to vector<1x8x32xf32>
    tpu.vector_store %arg5[%c0_6, %c0_7, %c0_8], %13 {strides = array<i32>} : memref<1x8x32xf32, #tpu.memory_space<vmem>>, vector<1x8x32xf32>,
    return
  }
  func.func @transform_0(%arg0: i32, %arg1: i32) -> (i32, i32, i32) {
    %c0_i32 = arith.constant 0 : i32
    %c0_i32_0 = arith.constant 0 : i32
    return %arg0, %arg1, %c0_i32 : i32, i32, i32
  }
  func.func @transform_1(%arg0: i32, %arg1: i32) -> (i32, i32) {
    %c0_i32 = arith.constant 0 : i32
    %c0_i32_0 = arith.constant 0 : i32
    %c0_i32_1 = arith.constant 0 : i32
    return %c0_i32, %c0_i32_0 : i32, i32
  }
  func.func @transform_2(%arg0: i32, %arg1: i32) -> (i32, i32) {
    %c0_i32 = arith.constant 0 : i32
    %c0_i32_0 = arith.constant 0 : i32
    return %arg1, %c0_i32 : i32, i32
  }
  func.func @transform_3(%arg0: i32, %arg1: i32) -> (i32, i32, i32) {
    %c0_i32 = arith.constant 0 : i32
    %c0_i32_0 = arith.constant 0 : i32
    return %arg0, %arg1, %c0_i32 : i32, i32, i32
  }
}

</mosaic_0001>

<llo_original>
// kernel: tpu_custom_call.1
$region0: #{tpu_custom_call.1}
  #allocation0 [shape = 'u32[]', space=smem, size = 0x4, offset = 0x4, fixed_abs, tag = 'smem constant byte address 0x4 - core index']
  #allocation1 [shape = 'u32[72,128]{1,0:T(1,128)}', space=vmem, size = 0x9000, scoped, tag = 'internal scratch']
  %s0 = inlined_call_operand.vmem [shape: s32[2,8,1], index: 0, kind: input, shape index: {}]
  %s1 = inlined_call_operand.hbm [shape: f32[32,32], index: 1, kind: input, shape index: {}]
  %s2 = inlined_call_operand.vmem [shape: f32[8,32], index: 2, kind: input, shape index: {}]
  %s3 = inlined_call_operand.hbm [shape: f32[2,8,32], index: 3, kind: output, shape index: {}]
  %s4 = sld [smem:[#allocation0]]
  $region49: #{tpu_custom_call.1} parent=0
    _
  %s6 = ssub.s32 1, %s4
  %s7 = scalar_select 0, %s6, %s4
  $region1: #{tpu_custom_call.1} parent=0
    #allocation2 [shape = 'u8[16384]{0}', space=vmem, size = 0x4000, scoped, tag = 'input window, operand 1, single buffered']
    #allocation3 [shape = 's32[2]{0}', space=sflag, size = 0x8, scoped, tag = 'scoped memory for tpu_custom_call.1']
    #allocation4 [shape = 's32[2]{0}', space=sflag, size = 0x8, scoped, tag = 'scoped memory for tpu_custom_call.1']
    #allocation5 [shape = 'u8[8192]{0}', space=vmem, size = 0x2000, scoped, tag = 'output window, operand 0']
    %8 = vsyncpa [#allocation3], 0
    %9 = vsyncpa [#allocation4], 0
    %s10 = scalar_lea.sflag [#allocation4], 1
    %11 = vsyncpa %s10, 0
    loop: start=0, step=1, limit=4
    $region2: #{tpu_custom_call.1} parent=1 // loop_pre_header
      _
    $region3: #{tpu_custom_call.1} parent=1 // loop_header
      %s13 = sphi 0, %s17
      %p14 = scmp.ge.s32.totalorder %s13, 4
      %s20 = sphi 0, %s32
      %s21 = sphi 0, %s28
      %s22 = sphi 0, %s20
      %s23 = sphi 0, %s21
      %s24 = sphi 0, %s22
      %s25 = sphi 0, %s23
      %s37 = sphi 0, %s39
      %s40 = sphi 0, %s37
      %s41 = sphi 0, %s40
      %s57 = sphi 0, %s41
      %s61 = sphi 0, %s61
      %s63 = sphi 0, %s61
      %s64 = sphi 0, %s63
      %s78 = sphi 0, %s64
      %s84 = sphi 0, %s86
      %s87 = sphi 0, %s84
      %s88 = sphi 0, %s87
      %s104 = sphi 0, %s88
      %s112 = sphi 0, %s114
      %s115 = sphi 0, %s112
      %s116 = sphi 0, %s115
      %s132 = sphi 0, %s116
    $region4: #{tpu_custom_call.1} parent=1 // loop_header_branch
      %16 = sbr.rel (%p14) target = $region8
    $region5: #{tpu_custom_call.1} parent=1 // loop_body
      %s18 = ssub.s32 %s13, 1
      %s19 = ssub.s32 %s13, 2
      %s26 = sadd.s32 1, %s21
      %p27 = scmp.ge.s32.totalorder %s26, 1
      %s28 = scalar_select %p27, 0, %s26
      %s29 = sadd.s32 1, %s20
      %s30 = scalar_select %p27, %s29, %s20
      %p31 = scmp.ge.s32.totalorder %s30, 2
      %s32 = scalar_select %p31, 0, %s30
      %s33 = ssub.s32 %s20, %s32
      %s34 = ssub.s32 %s21, %s28
      %s35 = sor.u32 %s33, %s34
      %p36 = scmp.eq.s32.totalorder %s35, 0
      %s38 = sadd.s32 %s37, 1
      %s39 = scalar_select %p36, %s37, %s38
      %p42 = pneg %p36
      %p43 = scmp.eq.s32.totalorder %s13, 1
      %p44 = por %p42, %p43
      %p45 = scmp.ne.s32.totalorder %s37, %s40
      %p46 = scmp.eq.s32.totalorder %s13, 0
      %p47 = por %p45, %p46
      %p48 = scmp.ne.s32.totalorder %s37, %s40
      %p49 = scmp.eq.s32.totalorder %s18, 1
      %p50 = por %p48, %p49
      %p51 = scmp.ne.s32.totalorder %s40, %s41
      %p52 = scmp.eq.s32.totalorder %s18, 0
      %p53 = por %p51, %p52
      %p54 = scmp.ne.s32.totalorder %s40, %s41
      %p55 = scmp.eq.s32.totalorder %s19, 1
      %p56 = por %p54, %p55
      %p58 = scmp.ne.s32.totalorder %s41, %s57
      %p59 = scmp.eq.s32.totalorder %s19, 0
      %p60 = por %p58, %p59
      %s62 = sadd.s32 %s61, 1
      %p65 = scmp.eq.s32.totalorder %s13, 1
      %p66 = scmp.ne.s32.totalorder %s61, %s63
      %p67 = scmp.eq.s32.totalorder %s13, 0
      %p68 = por %p66, %p67
      %p69 = scmp.ne.s32.totalorder %s61, %s63
      %p70 = scmp.eq.s32.totalorder %s18, 1
      %p71 = por %p69, %p70
      %p72 = scmp.ne.s32.totalorder %s63, %s64
      %p73 = scmp.eq.s32.totalorder %s18, 0
      %p74 = por %p72, %p73
      %p75 = scmp.ne.s32.totalorder %s63, %s64
      %p76 = scmp.eq.s32.totalorder %s19, 1
      %p77 = por %p75, %p76
      %p79 = scmp.ne.s32.totalorder %s64, %s78
      %p80 = scmp.eq.s32.totalorder %s19, 0
      %p81 = por %p79, %p80
      %s82 = ssub.s32 %s21, %s28
      %p83 = scmp.eq.s32.totalorder %s82, 0
      %s85 = sadd.s32 %s84, 1
      %s86 = scalar_select %p83, %s84, %s85
      %p89 = pneg %p83
      %p90 = scmp.eq.s32.totalorder %s13, 1
      %p91 = por %p89, %p90
      %p92 = scmp.ne.s32.totalorder %s84, %s87
      %p93 = scmp.eq.s32.totalorder %s13, 0
      %p94 = por %p92, %p93
      %p95 = scmp.ne.s32.totalorder %s84, %s87
      %p96 = scmp.eq.s32.totalorder %s18, 1
      %p97 = por %p95, %p96
      %p98 = scmp.ne.s32.totalorder %s87, %s88
      %p99 = scmp.eq.s32.totalorder %s18, 0
      %p100 = por %p98, %p99
      %p101 = scmp.ne.s32.totalorder %s87, %s88
      %p102 = scmp.eq.s32.totalorder %s19, 1
      %p103 = por %p101, %p102
      %p105 = scmp.ne.s32.totalorder %s88, %s104
      %p106 = scmp.eq.s32.totalorder %s19, 0
      %p107 = por %p105, %p106
      %s108 = ssub.s32 %s20, %s32
      %s109 = ssub.s32 %s21, %s28
      %s110 = sor.u32 %s108, %s109
      %p111 = scmp.eq.s32.totalorder %s110, 0
      %s113 = sadd.s32 %s112, 1
      %s114 = scalar_select %p111, %s112, %s113
      %p117 = pneg %p111
      %p118 = scmp.eq.s32.totalorder %s13, 1
      %p119 = por %p117, %p118
      %p120 = scmp.ne.s32.totalorder %s112, %s115
      %p121 = scmp.eq.s32.totalorder %s13, 0
      %p122 = por %p120, %p121
      %p123 = scmp.ne.s32.totalorder %s112, %s115
      %p124 = scmp.eq.s32.totalorder %s18, 1
      %p125 = por %p123, %p124
      %p126 = scmp.ne.s32.totalorder %s115, %s116
      %p127 = scmp.eq.s32.totalorder %s18, 0
      %p128 = por %p126, %p127
      %p129 = scmp.ne.s32.totalorder %s115, %s116
      %p130 = scmp.eq.s32.totalorder %s19, 1
      %p131 = por %p129, %p130
      %p133 = scmp.ne.s32.totalorder %s116, %s132
      %p134 = scmp.eq.s32.totalorder %s19, 0
      %p135 = por %p133, %p134
      %p136 = scmp.le.s32.totalorder 1, %s13
      %p137 = scmp.lt.s32.totalorder %s13, 3
      %p138 = pnand %p136, %p137
      %p139 = pneg %p138
      // Predicated region
      $region9: #{tpu_custom_call.1} parent=5 // pred_check
        _
      $region10: #{tpu_custom_call.1} parent=5 // pred_check_branch
        %141 = sbr.rel (%p138) target = $region12
      $region11: #{tpu_custom_call.1} parent=5 // pred_region
        %s142 = ssub.s32 %s13, 1
        // Predicated region
        $region13: #{tpu_custom_call.1} parent=11 // pred_check
          %p143 = pneg %p74
        $region14: #{tpu_custom_call.1} parent=11 // pred_check_branch
          %145 = sbr.rel (%p143) target = $region16
        $region15: #{tpu_custom_call.1} parent=11 // pred_region
          %147 = vsyncadd [#allocation3], 0
          %s148 = sshll.u32 %s1, 4
          %s149 = int_to_ptr.hbm [resolvable:$true] %s148
          %s150 = sshll.u32 [#allocation2], 4
          %s151 = int_to_ptr.vmem [resolvable:$true] %s150
          %156 = dma.hbm_to_vmem [thread:$0]  %s149, 512, %s151, [#allocation3], 128, 128, 8
        $region16: #{tpu_custom_call.1} parent=11 // pred_fallthru
          _
        // Predicated region
        $region17: #{tpu_custom_call.1} parent=11 // pred_check
          %p157 = pneg %p100
        $region18: #{tpu_custom_call.1} parent=11 // pred_check_branch
          %159 = sbr.rel (%p157) target = $region20
        $region19: #{tpu_custom_call.1} parent=11 // pred_region
          %p160 = scmp.lt.s32.totalorder %s23, 0
          %s161 = scalar_select %p160, %s23, 0
          %s162 = smul.addr %s161, 8
          %s163 = scalar_lea.vmem %s2, %s162
        $region20: #{tpu_custom_call.1} parent=11 // pred_fallthru
          _
      $region12: #{tpu_custom_call.1} parent=5 // pred_fallthru
        _
      %p164 = scmp.lt.s32.totalorder %s13, 2
      // Predicated region
      $region21: #{tpu_custom_call.1} parent=5 // pred_check
        %p165 = pneg %p164
      $region22: #{tpu_custom_call.1} parent=5 // pred_check_branch
        %167 = sbr.rel (%p165) target = $region24
      $region23: #{tpu_custom_call.1} parent=5 // pred_region
        // Predicated region
        $region25: #{tpu_custom_call.1} parent=23 // pred_check
          %p168 = pneg %p47
        $region26: #{tpu_custom_call.1} parent=23 // pred_check_branch
          %170 = sbr.rel (%p168) target = $region28
        $region27: #{tpu_custom_call.1} parent=23 // pred_region
          %p171 = scmp.lt.s32.totalorder %s20, 1
          %s172 = scalar_select %p171, %s20, 1
          %p173 = scmp.lt.s32.totalorder %s21, 0
          %s174 = scalar_select %p173, %s21, 0
          %s175 = sadd.s32 %s174, %s172
          %s176 = smul.addr %s175, 8
          %s177 = scalar_lea.vmem %s0, %s176
        $region28: #{tpu_custom_call.1} parent=23 // pred_fallthru
          _
      $region24: #{tpu_custom_call.1} parent=5 // pred_fallthru
        _
      %p178 = scmp.le.s32.totalorder 1, %s13
      %p179 = scmp.lt.s32.totalorder %s13, 3
      %p180 = pnand %p178, %p179
      %p181 = pneg %p180
      // Predicated region
      $region29: #{tpu_custom_call.1} parent=5 // pred_check
        _
      $region30: #{tpu_custom_call.1} parent=5 // pred_check_branch
        %183 = sbr.rel (%p180) target = $region32
      $region31: #{tpu_custom_call.1} parent=5 // pred_region
        %s184 = ssub.s32 %s13, 1
        // Predicated region
        $region33: #{tpu_custom_call.1} parent=31 // pred_check
          %p185 = pneg %p74
        $region34: #{tpu_custom_call.1} parent=31 // pred_check_branch
          %187 = sbr.rel (%p185) target = $region36
        $region35: #{tpu_custom_call.1} parent=31 // pred_region
          %189 = dma.done [#allocation3], 512
        $region36: #{tpu_custom_call.1} parent=31 // pred_fallthru
          _
        %p190 = scmp.lt.s32.totalorder %s22, 1
        %s191 = scalar_select %p190, %s22, 1
        %p192 = scmp.lt.s32.totalorder %s23, 0
        %s193 = scalar_select %p192, %s23, 0
        %s194 = sadd.s32 %s193, %s191
        %s195 = smul.addr %s194, 8
        %s196 = scalar_lea.vmem %s0, %s195
        %p197 = pneg %p53
        %p198 = pneg %p50
        %p199 = pneg %p74
        %p200 = pneg %p71
        %p201 = scmp.lt.s32.totalorder %s23, 0
        %s202 = scalar_select %p201, %s23, 0
        %s203 = smul.addr %s202, 8
        %s204 = scalar_lea.vmem %s2, %s203
        %p205 = pneg %p100
        %p206 = pneg %p97
        %p207 = pneg %p128
        %p208 = pneg %p125
        %s209 = sand.u32 %s115, 1
        %s210 = scalar_lea.sflag [#allocation4], %s209
        %s211 = sand.u32 %s115, 1
        %s212 = smul.addr %s211, 8
        %s213 = scalar_lea.vmem [#allocation5], %s212
        %p214 = scmp.lt.s32.totalorder %s22, 1
        %s215 = scalar_select %p214, %s22, 1
        %p216 = scmp.lt.s32.totalorder %s23, 0
        %s217 = scalar_select %p216, %s23, 0
        %s218 = sadd.s32 %s217, %s215
        %s219 = smul.addr %s218, 8
        %s220 = scalar_lea.vmem %s0, %s219
        %p221 = scmp.lt.s32.totalorder %s23, 0
        %s222 = scalar_select %p221, %s23, 0
        %s223 = smul.addr %s222, 8
        %s224 = scalar_lea.vmem %s2, %s223
        %v225 = vld [vmem:[%s220] sm:$0xff]
        %v226 = vlaneseq
        %v227 = vand.u32 %v226, 127
        %228 = vset.pattern.permute.xlu0 0
        %229 = vperm.xlu0 %228, %v225
        %v230 = vpop.permute.xlu0 %229
        %vm231 = vcmp.eq.s32.totalorder %v230, %v227
        %v232 = vsel %vm231, 1, 0
        %v233 = vcvt.s32.f32 %v232
        %v234 = vld [vmem:[#allocation2] sm:$0xff]
        %v235 = vld [vmem:[#allocation2 + $0x8] sm:$0xff]
        %v236 = vld [vmem:[#allocation2 + $0x10] sm:$0xff]
        %v237 = vld [vmem:[#allocation2 + $0x18] sm:$0xff]
        %v238 = vld [vmem:[%s224] sm:$0xff]
        %vm239 = vcmask 261120
        %v241 = vsel %vm239, %v233, 0
        %243 = vmatpush.msra.mxu0 0.0
        %244 = vmatpush.msra.mxu0 0.0
        %245 = vmatpush.msra.mxu0 0.0
        %246 = vmatpush.msra.mxu0 0.0
        %247 = vmatpush.msra.mxu0 0.0
        %248 = vmatpush.msra.mxu0 0.0
        %249 = vmatpush.msra.mxu0 0.0
        %250 = vmatpush.msra.mxu0 0.0
        %251 = vmatpush.msra.mxu0 0.0
        %252 = vmatpush.msra.mxu0 0.0
        %253 = vmatpush.msra.mxu0 0.0
        %254 = vmatpush.msra.mxu0 0.0
        %v255 = vand.u32 %v237, 4294901760
        %256 = vmatpush.msra.mxu0 %v255
        %v257 = vand.u32 %v236, 4294901760
        %258 = vmatpush.msra.mxu0 %v257
        %v259 = vand.u32 %v235, 4294901760
        %260 = vmatpush.msra.mxu0 %v259
        %v261 = vand.u32 %v234, 4294901760
        %262 = vmatpush.msra.mxu0 %v261
        %v263 = vand.u32 %v241, 4294901760
        %v264 = vsub.f32 %v241, %v263
        %v265 = vand.u32 %v264, 4294901760
        %v266 = vsub.f32 %v264, %v265
        %v267 = vand.u32 %v266, 4294901760
        %268 = vmatmul.f32.gmra.mxu0 %v267
        %v269 = vpop.f32.mrf.mxu0
        %v270 = vadd.f32 %v238, %v269
        %271 = vdwg.mxu0
        %272 = vmatpush.msra.mxu0 0.0
        %273 = vmatpush.msra.mxu0 0.0
        %274 = vmatpush.msra.mxu0 0.0
        %275 = vmatpush.msra.mxu0 0.0
        %276 = vmatpush.msra.mxu0 0.0
        %277 = vmatpush.msra.mxu0 0.0
        %278 = vmatpush.msra.mxu0 0.0
        %279 = vmatpush.msra.mxu0 0.0
        %280 = vmatpush.msra.mxu0 0.0
        %281 = vmatpush.msra.mxu0 0.0
        %282 = vmatpush.msra.mxu0 0.0
        %283 = vmatpush.msra.mxu0 0.0
        %v284 = vand.u32 %v237, 4294901760
        %v285 = vsub.f32 %v237, %v284
        %v286 = vand.u32 %v285, 4294901760
        %v287 = vsub.f32 %v285, %v286
        %v288 = vand.u32 %v287, 4294901760
        %289 = vmatpush.msra.mxu0 %v288
        %v290 = vand.u32 %v236, 4294901760
        %v291 = vsub.f32 %v236, %v290
        %v292 = vand.u32 %v291, 4294901760
        %v293 = vsub.f32 %v291, %v292
        %v294 = vand.u32 %v293, 4294901760
        %295 = vmatpush.msra.mxu0 %v294
        %v296 = vand.u32 %v235, 4294901760
        %v297 = vsub.f32 %v235, %v296
        %v298 = vand.u32 %v297, 4294901760
        %v299 = vsub.f32 %v297, %v298
        %v300 = vand.u32 %v299, 4294901760
        %301 = vmatpush.msra.mxu0 %v300
        %v302 = vand.u32 %v234, 4294901760
        %v303 = vsub.f32 %v234, %v302
        %v304 = vand.u32 %v303, 4294901760
        %v305 = vsub.f32 %v303, %v304
        %v306 = vand.u32 %v305, 4294901760
        %307 = vmatpush.msra.mxu0 %v306
        %v308 = vand.u32 %v241, 4294901760
        %309 = vmatmul.f32.gmra.mxu0 %v308
        %v310 = vpop.f32.mrf.mxu0
        %v311 = vadd.f32 %v270, %v310
        %312 = vdwg.mxu0
        %313 = vmatpush.msra.mxu0 0.0
        %314 = vmatpush.msra.mxu0 0.0
        %315 = vmatpush.msra.mxu0 0.0
        %316 = vmatpush.msra.mxu0 0.0
        %317 = vmatpush.msra.mxu0 0.0
        %318 = vmatpush.msra.mxu0 0.0
        %319 = vmatpush.msra.mxu0 0.0
        %320 = vmatpush.msra.mxu0 0.0
        %321 = vmatpush.msra.mxu0 0.0
        %322 = vmatpush.msra.mxu0 0.0
        %323 = vmatpush.msra.mxu0 0.0
        %324 = vmatpush.msra.mxu0 0.0
        %v325 = vand.u32 %v237, 4294901760
        %v326 = vsub.f32 %v237, %v325
        %327 = vmatpush.msra.mxu0 %v326
        %v328 = vand.u32 %v236, 4294901760
        %v329 = vsub.f32 %v236, %v328
        %330 = vmatpush.msra.mxu0 %v329
        %v331 = vand.u32 %v235, 4294901760
        %v332 = vsub.f32 %v235, %v331
        %333 = vmatpush.msra.mxu0 %v332
        %v334 = vand.u32 %v234, 4294901760
        %v335 = vsub.f32 %v234, %v334
        %336 = vmatpush.msra.mxu0 %v335
        %v337 = vand.u32 %v241, 4294901760
        %v338 = vsub.f32 %v241, %v337
        %339 = vmatmul.f32.gmra.mxu0 %v338
        %v340 = vpop.f32.mrf.mxu0
        %v341 = vadd.f32 %v311, %v340
        %342 = vdwg.mxu0
        %343 = vmatpush.msra.mxu0 0.0
        %344 = vmatpush.msra.mxu0 0.0
        %345 = vmatpush.msra.mxu0 0.0
        %346 = vmatpush.msra.mxu0 0.0
        %347 = vmatpush.msra.mxu0 0.0
        %348 = vmatpush.msra.mxu0 0.0
        %349 = vmatpush.msra.mxu0 0.0
        %350 = vmatpush.msra.mxu0 0.0
        %351 = vmatpush.msra.mxu0 0.0
        %352 = vmatpush.msra.mxu0 0.0
        %353 = vmatpush.msra.mxu0 0.0
        %354 = vmatpush.msra.mxu0 0.0
        %v355 = vand.u32 %v237, 4294901760
        %356 = vmatpush.msra.mxu0 %v355
        %v357 = vand.u32 %v236, 4294901760
        %358 = vmatpush.msra.mxu0 %v357
        %v359 = vand.u32 %v235, 4294901760
        %360 = vmatpush.msra.mxu0 %v359
        %v361 = vand.u32 %v234, 4294901760
        %362 = vmatpush.msra.mxu0 %v361
        %v363 = vand.u32 %v241, 4294901760
        %v364 = vsub.f32 %v241, %v363
        %v365 = vand.u32 %v364, 4294901760
        %366 = vmatmul.f32.gmra.mxu0 %v365
        %v367 = vpop.f32.mrf.mxu0
        %v368 = vadd.f32 %v341, %v367
        %369 = vdwg.mxu0
        %370 = vmatpush.msra.mxu0 0.0
        %371 = vmatpush.msra.mxu0 0.0
        %372 = vmatpush.msra.mxu0 0.0
        %373 = vmatpush.msra.mxu0 0.0
        %374 = vmatpush.msra.mxu0 0.0
        %375 = vmatpush.msra.mxu0 0.0
        %376 = vmatpush.msra.mxu0 0.0
        %377 = vmatpush.msra.mxu0 0.0
        %378 = vmatpush.msra.mxu0 0.0
        %379 = vmatpush.msra.mxu0 0.0
        %380 = vmatpush.msra.mxu0 0.0
        %381 = vmatpush.msra.mxu0 0.0
        %v382 = vand.u32 %v237, 4294901760
        %v383 = vsub.f32 %v237, %v382
        %v384 = vand.u32 %v383, 4294901760
        %385 = vmatpush.msra.mxu0 %v384
        %v386 = vand.u32 %v236, 4294901760
        %v387 = vsub.f32 %v236, %v386
        %v388 = vand.u32 %v387, 4294901760
        %389 = vmatpush.msra.mxu0 %v388
        %v390 = vand.u32 %v235, 4294901760
        %v391 = vsub.f32 %v235, %v390
        %v392 = vand.u32 %v391, 4294901760
        %393 = vmatpush.msra.mxu0 %v392
        %v394 = vand.u32 %v234, 4294901760
        %v395 = vsub.f32 %v234, %v394
        %v396 = vand.u32 %v395, 4294901760
        %397 = vmatpush.msra.mxu0 %v396
        %v398 = vand.u32 %v241, 4294901760
        %399 = vmatmul.f32.gmra.mxu0 %v398
        %v400 = vpop.f32.mrf.mxu0
        %v401 = vadd.f32 %v368, %v400
        %402 = vdwg.mxu0
        %403 = vmatpush.msra.mxu0 0.0
        %404 = vmatpush.msra.mxu0 0.0
        %405 = vmatpush.msra.mxu0 0.0
        %406 = vmatpush.msra.mxu0 0.0
        %407 = vmatpush.msra.mxu0 0.0
        %408 = vmatpush.msra.mxu0 0.0
        %409 = vmatpush.msra.mxu0 0.0
        %410 = vmatpush.msra.mxu0 0.0
        %411 = vmatpush.msra.mxu0 0.0
        %412 = vmatpush.msra.mxu0 0.0
        %413 = vmatpush.msra.mxu0 0.0
        %414 = vmatpush.msra.mxu0 0.0
        %v415 = vand.u32 %v237, 4294901760
        %416 = vmatpush.msra.mxu0 %v415
        %v417 = vand.u32 %v236, 4294901760
        %418 = vmatpush.msra.mxu0 %v417
        %v419 = vand.u32 %v235, 4294901760
        %420 = vmatpush.msra.mxu0 %v419
        %v421 = vand.u32 %v234, 4294901760
        %422 = vmatpush.msra.mxu0 %v421
        %v423 = vand.u32 %v241, 4294901760
        %424 = vmatmul.f32.gmra.mxu0 %v423
        %v425 = vpop.f32.mrf.mxu0
        %v426 = vadd.f32 %v401, %v425
        %427 = vdwg.mxu0
        %428 = vst.msk [vmem:[%s213] sm:$0xff] %vm239, %v426
        %s429 = sand.u32 %s115, 1
        %s430 = scalar_lea.sflag [#allocation4], %s429
        %s431 = sand.u32 %s115, 1
        %s432 = smul.addr %s431, 8
        %s433 = scalar_lea.vmem [#allocation5], %s432
        // Predicated region
        $region37: #{tpu_custom_call.1} parent=31 // pred_check
          %p434 = pneg %p125
        $region38: #{tpu_custom_call.1} parent=31 // pred_check_branch
          %436 = sbr.rel (%p434) target = $region40
        $region39: #{tpu_custom_call.1} parent=31 // pred_region
          %438 = vsyncadd %s430, 0
          %s439 = sadd.s32 %s23, %s22
          %s440 = smul.addr %s439, 8
          %s441 = scalar_lea.hbm %s3, %s440
          %s443 = sshll.u32 %s433, 4
          %s444 = int_to_ptr.vmem [resolvable:$true] %s443
          %s445 = sshll.u32 %s441, 4
          %s446 = int_to_ptr.hbm [resolvable:$true] %s445
          %448 = dma.vmem_to_hbm [thread:$0]  %s444, 128, %s446, %s430
        $region40: #{tpu_custom_call.1} parent=31 // pred_fallthru
          _
      $region32: #{tpu_custom_call.1} parent=5 // pred_fallthru
        _
      %p449 = scmp.le.s32.totalorder 2, %s13
      // Predicated region
      $region41: #{tpu_custom_call.1} parent=5 // pred_check
        %p450 = pneg %p449
      $region42: #{tpu_custom_call.1} parent=5 // pred_check_branch
        %452 = sbr.rel (%p450) target = $region44
      $region43: #{tpu_custom_call.1} parent=5 // pred_region
        %s453 = ssub.s32 %s13, 2
        // Predicated region
        $region45: #{tpu_custom_call.1} parent=43 // pred_check
          %p454 = pneg %p131
        $region46: #{tpu_custom_call.1} parent=43 // pred_check_branch
          %456 = sbr.rel (%p454) target = $region48
        $region47: #{tpu_custom_call.1} parent=43 // pred_region
          %s457 = sand.u32 %s116, 1
          %s458 = scalar_lea.sflag [#allocation4], %s457
          %s459 = sand.u32 %s116, 1
          %s460 = smul.addr %s459, 8
          %s461 = scalar_lea.vmem [#allocation5], %s460
          %463 = dma.done %s458, 128
        $region48: #{tpu_custom_call.1} parent=43 // pred_fallthru
          _
      $region44: #{tpu_custom_call.1} parent=5 // pred_fallthru
        _
    $region6: #{tpu_custom_call.1} parent=1 // loop_footer
      %s17 = sadd.s32 1, %s13
    $region7: #{tpu_custom_call.1} parent=1 // loop_footer_branch
      %12 = sbr.rel target = $region3
    $region8: #{tpu_custom_call.1} parent=1 // loop_exit
      _
    %464 = vsyncpa [#allocation3], 1
    %s465 = scalar_lea.sflag [#allocation3], 1
    %466 = vsyncpa %s465, 1
    %467 = vsyncpa [#allocation4], 1
    %s468 = scalar_lea.sflag [#allocation4], 1
    %469 = vsyncpa %s468, 1

</llo_original>
